<compile_context>
chip_gen: v7x
topology: tpu7x:2x2x1
jax: 0.10.0
libtpu: 0.0.40
codegen_flags: <defaults>
</compile_context>

<pallas_src>
import jax
import jax.numpy as jnp
from jax.experimental import pallas as pl
from jax.experimental.pallas import tpu as pltpu


def _offset_scale_kernel(x_ref, gamma_ref, beta_ref, *o_refs):
    # x_ref:     (tile, D)  current tile of tokens (flattened batch*seq)
    # gamma_ref: (H, D)     fully resident scales (same block every grid step)
    # beta_ref:  (H, D)     fully resident offsets
    # o_refs[h]: (tile, D)  per-head output tile
    for h, o_ref in enumerate(o_refs):
        # Re-read x from VMEM per head (cheap vld) to keep vreg pressure low;
        # static (1, D) slices of gamma/beta broadcast over the token tile.
        o_ref[...] = (
            x_ref[...] * gamma_ref[h : h + 1, :] + beta_ref[h : h + 1, :]
        )


def offset_scale(x, gamma, beta, *, vmem_budget_bytes=24 << 20):
    """x: (B, S, D); gamma, beta: (H, D). Returns tuple of H arrays (B, S, D)."""
    B, S, D = x.shape
    H, Dg = gamma.shape
    assert Dg == D and beta.shape == (H, D)

    N = B * S
    x_flat = x.reshape(N, D)

    # One tiny one-time cast so the kernel's multiply/add stay in x.dtype
    # (avoids f32 promotion + per-store downcast for bf16 activations).
    gamma = gamma.astype(x.dtype)
    beta = beta.astype(x.dtype)

    itemsize = jnp.dtype(x.dtype).itemsize
    # Sublane alignment: 8 rows for 32-bit dtypes, 16 for 16-bit packing.
    sub = 16 if itemsize == 2 else 8

    # Tile sized from the double-buffered VMEM footprint:
    #   2 * (1 input + H outputs) * tile * D * itemsize
    per_row_bytes = 2 * (H + 1) * D * itemsize
    tile_budget = max(sub, (vmem_budget_bytes // per_row_bytes) // sub * sub)
    tile_budget = min(tile_budget, 8192)

    n_aligned = pl.cdiv(N, sub) * sub
    tile = min(tile_budget, n_aligned)
    # Keep >= 2 grid steps when possible so the "parallel" token axis can
    # actually shard across both TensorCores on v7x.
    if pl.cdiv(N, tile) < 2 and N > 2 * sub:
        tile = pl.cdiv(pl.cdiv(N, 2), sub) * sub

    grid = (pl.cdiv(N, tile),)  # final partial block masked by Pallas on store

    # Explicit scoped-VMEM request from the actual footprint (+ headroom),
    # capped below v7x's 64 MiB physical VMEM.
    footprint = 2 * (H + 1) * tile * D * itemsize + 4 * H * D * itemsize
    vmem_bytes = int(min(max(footprint + (2 << 20), 16 << 20), 48 << 20))

    cost = pl.CostEstimate(
        flops=2 * H * N * D,
        transcendentals=0,
        bytes_accessed=(1 + H) * N * D * itemsize + 2 * H * D * itemsize,
    )

    outs = pl.pallas_call(
        _offset_scale_kernel,
        out_shape=tuple(
            jax.ShapeDtypeStruct((N, D), x.dtype) for _ in range(H)
        ),
        grid_spec=pltpu.PrefetchScalarGridSpec(
            num_scalar_prefetch=0,
            grid=grid,
            in_specs=[
                pl.BlockSpec((tile, D), lambda i: (i, 0)),  # x tile (read once)
                pl.BlockSpec((H, D), lambda i: (0, 0)),     # gamma (resident)
                pl.BlockSpec((H, D), lambda i: (0, 0)),     # beta  (resident)
            ],
            out_specs=tuple(
                pl.BlockSpec((tile, D), lambda i: (i, 0)) for _ in range(H)
            ),
        ),
        compiler_params=pltpu.CompilerParams(
            dimension_semantics=("parallel",),
            vmem_limit_bytes=vmem_bytes,
        ),
        cost_estimate=cost,
    )(x_flat, gamma, beta)

    return tuple(o.reshape(B, S, D) for o in outs)


if __name__ == "__main__":
    # Module config: qk_dim=128, heads=2 (GAU)
    dim = 128
    heads = 2
    batch, seq = 2, 8

    key = jax.random.PRNGKey(0)
    k_x, k_g = jax.random.split(key)

    # Deterministic parameter init matching nn.init.normal_(gamma, std=0.02), beta=0
    gamma = (0.02 * jax.random.normal(k_g, (heads, dim))).astype(jnp.float32)
    beta = jnp.zeros((heads, dim), dtype=jnp.float32)

    x = jax.random.normal(k_x, (batch, seq, dim), dtype=jnp.float32)

    outs = offset_scale(x, gamma, beta)
    outs = jax.block_until_ready(outs)

    # Reference check (plain JAX, same semantics as the torch einsum + unbind)
    ref = x[:, :, None, :] * gamma[None, None, :, :] + beta[None, None, :, :]
    for h in range(heads):
        assert outs[h].shape == (batch, seq, dim)
        assert jnp.allclose(outs[h], ref[:, :, h, :], atol=1e-6, rtol=1e-6)

    print("KERNEL_OK")
</pallas_src>

<mosaic_0001>
module attributes {stable_mosaic.version = 11 : i64} {
  func.func @_offset_scale_kernel(%arg0: i32, %arg1: memref<16x128xf32, #tpu.memory_space<vmem>>, %arg2: memref<2x128xf32, #tpu.memory_space<vmem>>, %arg3: memref<2x128xf32, #tpu.memory_space<vmem>>, %arg4: memref<16x128xf32, #tpu.memory_space<vmem>>, %arg5: memref<16x128xf32, #tpu.memory_space<vmem>>) attributes {dimension_semantics = [#tpu.dimension_semantics<parallel>], iteration_bounds = array<i64: 1>, scalar_prefetch = 0 : i64, scratch_operands = 0 : i64, tpu.core_type = #tpu.core_type<tc>, window_params = [{transform_indices = @transform_0, window_bounds = array<i64: 16, 128>}, {pipeline_mode = #tpu.pipeline_mode<synchronous>, transform_indices = @transform_1, window_bounds = array<i64: 2, 128>}, {pipeline_mode = #tpu.pipeline_mode<synchronous>, transform_indices = @transform_2, window_bounds = array<i64: 2, 128>}, {transform_indices = @transform_3, window_bounds = array<i64: 16, 128>}, {transform_indices = @transform_4, window_bounds = array<i64: 16, 128>}]} {
    %c0 = arith.constant 0 : index
    %c0_0 = arith.constant 0 : index
    %0 = vector.load %arg1[%c0, %c0_0] : memref<16x128xf32, #tpu.memory_space<vmem>>, vector<16x128xf32>
    %c0_1 = arith.constant 0 : index
    %c0_2 = arith.constant 0 : index
    %1 = vector.load %arg2[%c0_1, %c0_2] : memref<2x128xf32, #tpu.memory_space<vmem>>, vector<1x128xf32>
    %2 = vector.broadcast %1 : vector<1x128xf32> to vector<16x128xf32>
    %3 = arith.mulf %0, %2 : vector<16x128xf32>
    %c0_3 = arith.constant 0 : index
    %c0_4 = arith.constant 0 : index
    %4 = vector.load %arg3[%c0_3, %c0_4] : memref<2x128xf32, #tpu.memory_space<vmem>>, vector<1x128xf32>
    %5 = vector.broadcast %4 : vector<1x128xf32> to vector<16x128xf32>
    %6 = arith.addf %3, %5 : vector<16x128xf32>
    %c0_5 = arith.constant 0 : index
    %c0_6 = arith.constant 0 : index
    %7 = vector.load %arg4[%c0_5, %c0_6] : memref<16x128xf32, #tpu.memory_space<vmem>>, vector<16x128xf32>
    tpu.vector_store %arg4[%c0_5, %c0_6], %6 {strides = array<i32>} : memref<16x128xf32, #tpu.memory_space<vmem>>, vector<16x128xf32>,
    %c0_7 = arith.constant 0 : index
    %c0_8 = arith.constant 0 : index
    %8 = vector.load %arg1[%c0_7, %c0_8] : memref<16x128xf32, #tpu.memory_space<vmem>>, vector<16x128xf32>
    %c1 = arith.constant 1 : index
    %c0_9 = arith.constant 0 : index
    %9 = vector.load %arg2[%c1, %c0_9] : memref<2x128xf32, #tpu.memory_space<vmem>>, vector<1x128xf32>
    %10 = vector.broadcast %9 : vector<1x128xf32> to vector<16x128xf32>
    %11 = arith.mulf %8, %10 : vector<16x128xf32>
    %c1_10 = arith.constant 1 : index
    %c0_11 = arith.constant 0 : index
    %12 = vector.load %arg3[%c1_10, %c0_11] : memref<2x128xf32, #tpu.memory_space<vmem>>, vector<1x128xf32>
    %13 = vector.broadcast %12 : vector<1x128xf32> to vector<16x128xf32>
    %14 = arith.addf %11, %13 : vector<16x128xf32>
    %c0_12 = arith.constant 0 : index
    %c0_13 = arith.constant 0 : index
    %15 = vector.load %arg5[%c0_12, %c0_13] : memref<16x128xf32, #tpu.memory_space<vmem>>, vector<16x128xf32>
    tpu.vector_store %arg5[%c0_12, %c0_13], %14 {strides = array<i32>} : memref<16x128xf32, #tpu.memory_space<vmem>>, vector<16x128xf32>,
    return
  }
  func.func @transform_0(%arg0: i32) -> (i32, i32) {
    %c0_i32 = arith.constant 0 : i32
    %c0_i32_0 = arith.constant 0 : i32
    return %arg0, %c0_i32 : i32, i32
  }
  func.func @transform_1(%arg0: i32) -> (i32, i32) {
    %c0_i32 = arith.constant 0 : i32
    %c0_i32_0 = arith.constant 0 : i32
    %c0_i32_1 = arith.constant 0 : i32
    return %c0_i32, %c0_i32_0 : i32, i32
  }
  func.func @transform_2(%arg0: i32) -> (i32, i32) {
    %c0_i32 = arith.constant 0 : i32
    %c0_i32_0 = arith.constant 0 : i32
    %c0_i32_1 = arith.constant 0 : i32
    return %c0_i32, %c0_i32_0 : i32, i32
  }
  func.func @transform_3(%arg0: i32) -> (i32, i32) {
    %c0_i32 = arith.constant 0 : i32
    %c0_i32_0 = arith.constant 0 : i32
    return %arg0, %c0_i32 : i32, i32
  }
  func.func @transform_4(%arg0: i32) -> (i32, i32) {
    %c0_i32 = arith.constant 0 : i32
    %c0_i32_0 = arith.constant 0 : i32
    return %arg0, %c0_i32 : i32, i32
  }
}

</mosaic_0001>

<llo_original>
// kernel: tpu_custom_call.1
$region0: #{tpu_custom_call.1}
  #allocation0 [shape = 'u32[]', space=smem, size = 0x4, offset = 0x4, fixed_abs, tag = 'smem constant byte address 0x4 - core index']
  #allocation1 [shape = 'u32[144,128]{1,0:T(1,128)}', space=vmem, size = 0x12000, scoped, tag = 'internal scratch']
  %s0 = inlined_call_operand.hbm [shape: f32[16,128], index: 0, kind: input, shape index: {}]
  %s1 = inlined_call_operand.vmem [shape: f32[2,128], index: 1, kind: input, shape index: {}]
  %s2 = inlined_call_operand.vmem [shape: f32[2,128], index: 2, kind: input, shape index: {}]
  %s3 = inlined_call_operand.hbm [shape: f32[16,128], index: 3, kind: output, shape index: {0}]
  %s4 = inlined_call_operand.hbm [shape: f32[16,128], index: 4, kind: output, shape index: {1}]
  %5 = xla_tuple %s3, %s4
  %s6 = sld [smem:[#allocation0]]
  $region34: #{tpu_custom_call.1} parent=0
    _
  %s8 = ssub.s32 1, %s6
  %s9 = scalar_select 0, %s8, %s6
  $region1: #{tpu_custom_call.1} parent=0
    #allocation2 [shape = 'u8[8192]{0}', space=vmem, size = 0x2000, scoped, tag = 'input window, operand 0, single buffered']
    #allocation3 [shape = 's32[1]{0}', space=sflag, size = 0x4, scoped, tag = 'scoped memory for tpu_custom_call.1']
    #allocation4 [shape = 's32[1]{0}', space=sflag, size = 0x4, scoped, tag = 'scoped memory for tpu_custom_call.1']
    #allocation5 [shape = 'u8[8192]{0}', space=vmem, size = 0x2000, scoped, tag = 'output window, operand 0, single buffered']
    #allocation6 [shape = 'u8[8192]{0}', space=vmem, size = 0x2000, scoped, tag = 'output window, operand 1, single buffered']
    #allocation7 [shape = 's32[1]{0}', space=sflag, size = 0x4, scoped, tag = 'scoped memory for tpu_custom_call.1']
    %10 = vsyncpa [#allocation3], 0
    %11 = vsyncpa [#allocation4], 0
    %12 = vsyncpa [#allocation7], 0
    // Predicated region
    $region2: #{tpu_custom_call.1} parent=1 // pred_check
      _
    $region3: #{tpu_custom_call.1} parent=1 // pred_check_branch
      %14 = sbr.rel (0) target = $region5
    $region4: #{tpu_custom_call.1} parent=1 // pred_region
      %s16 = ssub.s32 256, 256
      %17 = vsyncadd [#allocation3], %s16
      %s18 = sshll.u32 [#allocation2], 4
      %s19 = int_to_ptr.vmem [resolvable:$true] %s18
      %24 = dma.hbm_to_vmem [thread:$0]  %s0, 256, %s19, [#allocation3], 128, 128, 8
    $region5: #{tpu_custom_call.1} parent=1 // pred_fallthru
      _
    // Predicated region
    $region6: #{tpu_custom_call.1} parent=1 // pred_check
      _
    $region7: #{tpu_custom_call.1} parent=1 // pred_check_branch
      %26 = sbr.rel (0) target = $region9
    $region8: #{tpu_custom_call.1} parent=1 // pred_region
      _
    $region9: #{tpu_custom_call.1} parent=1 // pred_fallthru
      _
    // Predicated region
    $region10: #{tpu_custom_call.1} parent=1 // pred_check
      _
    $region11: #{tpu_custom_call.1} parent=1 // pred_check_branch
      %28 = sbr.rel (0) target = $region13
    $region12: #{tpu_custom_call.1} parent=1 // pred_region
      _
    $region13: #{tpu_custom_call.1} parent=1 // pred_fallthru
      _
    // Predicated region
    $region14: #{tpu_custom_call.1} parent=1 // pred_check
      _
    $region15: #{tpu_custom_call.1} parent=1 // pred_check_branch
      %30 = sbr.rel (0) target = $region17
    $region16: #{tpu_custom_call.1} parent=1 // pred_region
      %31 = dma.done [#allocation3], 256
    $region17: #{tpu_custom_call.1} parent=1 // pred_fallthru
      _
    %v32 = vld [vmem:[#allocation2] sm:$0xff]
    %v33 = vld [vmem:[#allocation2 + $0x8] sm:$0xff]
    %v34 = vld [vmem:[%s1] sm:$0x1]
    %v35 = vlaneseq
    %v36 = vshrl.u32 %v35, 7
    %v37 = vsub.s32 0, %v36
    %v38 = vrot.slane %v34, %v37
    %v39 = vmul.f32 %v32, %v38
    %v40 = vmul.f32 %v33, %v38
    %v41 = vld [vmem:[%s2] sm:$0x1]
    %v42 = vlaneseq
    %v43 = vshrl.u32 %v42, 7
    %v44 = vsub.s32 0, %v43
    %v45 = vrot.slane %v41, %v44
    %v46 = vadd.f32 %v39, %v45
    %v47 = vadd.f32 %v40, %v45
    %48 = vst [vmem:[#allocation5] sm:$0xff] %v46
    %49 = vst [vmem:[#allocation5 + $0x8] sm:$0xff] %v47
    %v50 = vld [vmem:[#allocation2] sm:$0xff]
    %v51 = vld [vmem:[#allocation2 + $0x8] sm:$0xff]
    %v52 = vld [vmem:[%s1 + $0x1] sm:$0x1]
    %v53 = vlaneseq
    %v54 = vshrl.u32 %v53, 7
    %v55 = vsub.s32 0, %v54
    %v56 = vrot.slane %v52, %v55
    %v57 = vmul.f32 %v50, %v56
    %v58 = vmul.f32 %v51, %v56
    %v59 = vld [vmem:[%s2 + $0x1] sm:$0x1]
    %v60 = vlaneseq
    %v61 = vshrl.u32 %v60, 7
    %v62 = vsub.s32 0, %v61
    %v63 = vrot.slane %v59, %v62
    %v64 = vadd.f32 %v57, %v63
    %v65 = vadd.f32 %v58, %v63
    %66 = vst [vmem:[#allocation6] sm:$0xff] %v64
    %67 = vst [vmem:[#allocation6 + $0x8] sm:$0xff] %v65
    // Predicated region
    $region18: #{tpu_custom_call.1} parent=1 // pred_check
      _
    $region19: #{tpu_custom_call.1} parent=1 // pred_check_branch
      %69 = sbr.rel (0) target = $region21
    $region20: #{tpu_custom_call.1} parent=1 // pred_region
      %s71 = ssub.s32 256, 256
      %72 = vsyncadd [#allocation4], %s71
      %s73 = sshll.u32 [#allocation5], 4
      %s74 = int_to_ptr.vmem [resolvable:$true] %s73
      %79 = dma.vmem_to_hbm [thread:$0]  %s74, 256, %s3, [#allocation4], 128, 128, 8
    $region21: #{tpu_custom_call.1} parent=1 // pred_fallthru
      _
    // Predicated region
    $region22: #{tpu_custom_call.1} parent=1 // pred_check
      _
    $region23: #{tpu_custom_call.1} parent=1 // pred_check_branch
      %81 = sbr.rel (0) target = $region25
    $region24: #{tpu_custom_call.1} parent=1 // pred_region
      %s83 = ssub.s32 256, 256
      %84 = vsyncadd [#allocation7], %s83
      %s85 = sshll.u32 [#allocation6], 4
      %s86 = int_to_ptr.vmem [resolvable:$true] %s85
      %91 = dma.vmem_to_hbm [thread:$0]  %s86, 256, %s4, [#allocation7], 128, 128, 8
    $region25: #{tpu_custom_call.1} parent=1 // pred_fallthru
      _
    // Predicated region
    $region26: #{tpu_custom_call.1} parent=1 // pred_check
      _
    $region27: #{tpu_custom_call.1} parent=1 // pred_check_branch
      %93 = sbr.rel (0) target = $region29
    $region28: #{tpu_custom_call.1} parent=1 // pred_region
      %94 = dma.done [#allocation4], 256
    $region29: #{tpu_custom_call.1} parent=1 // pred_fallthru
      _
    // Predicated region
    $region30: #{tpu_custom_call.1} parent=1 // pred_check
      _
    $region31: #{tpu_custom_call.1} parent=1 // pred_check_branch
      %96 = sbr.rel (0) target = $region33
    $region32: #{tpu_custom_call.1} parent=1 // pred_region
      %97 = dma.done [#allocation7], 256
    $region33: #{tpu_custom_call.1} parent=1 // pred_fallthru
      _
    %98 = vsyncpa [#allocation3], 1
    %99 = vsyncpa [#allocation4], 1
    %100 = vsyncpa [#allocation7], 1

</llo_original>
